<compile_context>
chip_gen: v7x
topology: tpu7x:2x2x1
jax: 0.10.0
libtpu: 0.0.40
codegen_flags: <defaults>
</compile_context>

<pallas_src>
import jax
import jax.numpy as jnp
from jax import lax
from jax.experimental import pallas as pl
from jax.experimental.pallas import tpu as pltpu


def _round_up(x: int, m: int) -> int:
    return (x + m - 1) // m * m


def _round_down(x: int, m: int) -> int:
    return x // m * m


def _device_kind() -> str:
    try:
        return jax.devices()[0].device_kind.lower()
    except Exception:
        return ""


def _make_kernel(*, B, L, tile_b, rows_chunk, num_tiles, needs_row_mask, hard_targets):
    """Builds the kernel body; all tiling parameters are baked in as Python constants."""
    n_chunks = tile_b // rows_chunk
    groups = rows_chunk // 8
    assert tile_b % rows_chunk == 0 and rows_chunk % 8 == 0

    def fold8(x):
        # (rows_chunk, L) -> (8, L): add 8-row groups together. Static, sublane-aligned
        # slices -> pure VPU adds, no XLU cross-lane reduction and no reshape.
        acc = x[0:8, :]
        for g in range(1, groups):
            acc = acc + x[g * 8:(g + 1) * 8, :]
        return acc

    def kernel(p_ref, t_ref, bce_ref, cnt_ref, psq_ref, tsq_ref):
        tile_idx = pl.program_id(1)

        @pl.when(tile_idx == 0)
        def _init():
            bce_ref[...] = jnp.zeros_like(bce_ref)
            cnt_ref[...] = jnp.zeros_like(cnt_ref)
            psq_ref[...] = jnp.zeros_like(psq_ref)
            tsq_ref[...] = jnp.zeros_like(tsq_ref)

        # Logical (unclamped) first row of this tile; used only for tail masking.
        tile_base = (pl.program_id(0) * num_tiles + tile_idx) * tile_b

        def chunk_body(s, carry):
            bce_c, cnt_c, psq_c, tsq_c = carry
            r0 = pl.multiple_of(s * rows_chunk, rows_chunk)
            p = p_ref[pl.ds(r0, rows_chunk), :].astype(jnp.float32)
            t = t_ref[pl.ds(r0, rows_chunk), :].astype(jnp.float32)

            if needs_row_mask:
                # Zero out rows past the real batch (garbage from the ragged edge DMA).
                # (p=0, t=0) contributes exactly 0 to every partial sum below.
                row = lax.broadcasted_iota(jnp.int32, (rows_chunk, L), 0)
                valid = (tile_base + r0 + row) < B
                p = jnp.where(valid, p, 0.0)
                t = jnp.where(valid, t, 0.0)

            pos = t != 0.0
            if hard_targets:
                # Exact for t in {0, 1}: one log per element (keeps EUP under the HBM roofline).
                sel = jnp.where(pos, p, 1.0 - p)
                bce_e = -jnp.maximum(jnp.log(sel), -100.0)
                cnt_e = t
            else:
                # Exact torch BCELoss semantics for soft targets (two clamped logs).
                log_p = jnp.maximum(jnp.log(p), -100.0)
                log_q = jnp.maximum(jnp.log(1.0 - p), -100.0)
                bce_e = -(t * log_p + (1.0 - t) * log_q)
                cnt_e = pos.astype(jnp.float32)

            diff = p - t
            tot = diff * diff                 # on negatives t==0, so (p-t)^2 == p^2 exactly
            psq = jnp.where(pos, tot, 0.0)    # positives only; negatives derived in wrapper

            return (bce_c + fold8(bce_e), cnt_c + fold8(cnt_e),
                    psq_c + fold8(psq), tsq_c + fold8(tot))

        zero = jnp.zeros((8, L), jnp.float32)
        bce_c, cnt_c, psq_c, tsq_c = lax.fori_loop(
            0, n_chunks, chunk_body, (zero, zero, zero, zero))

        # Single read-modify-write of the resident accumulators per grid step.
        bce_ref[...] += bce_c
        cnt_ref[...] += cnt_c
        psq_ref[...] += psq_c
        tsq_ref[...] += tsq_c

    return kernel


def multilabel_loss(pred, target, *, hard_targets=True, num_cores=None):
    """pred, target: (batch, num_labels). Returns scalar float32 loss.

    hard_targets=True uses a single-log BCE that is exact for multi-hot {0,1} targets
    (the module's use case) and counts positives as sum(t); pass hard_targets=False
    for soft / non-binary targets to get the exact two-log torch.BCELoss form.
    """
    assert pred.shape == target.shape and pred.ndim == 2
    B, L = pred.shape
    p_item = pred.dtype.itemsize
    t_item = target.dtype.itemsize

    kind = _device_kind()
    if num_cores is None:
        # 2 TensorCores per chip on v7x-class parts; 1 on v5e / v6e.
        num_cores = 2 if "v7" in kind else 1

    L_lanes = _round_up(L, 128)  # lane-padded width (VMEM layout only; we never pad data)
    # TODO(synk): tile the label dimension for extremely wide label spaces; typical
    # multi-label L fits one lane-tiled row slab comfortably.

    # Rows per inner chunk: ~8K elements per chunk keeps the per-iteration vector
    # working set at a handful of vregs (no full-tile f32 temporaries / spills).
    rows_chunk = max(16, _round_down(8192 // L_lanes, 16))

    # Never split a tiny batch across cores.
    num_cores = max(1, min(num_cores, max(1, pl.cdiv(B, rows_chunk))))

    # HBM block target per grid step (pred + target together), per generation.
    if "v7" in kind:
        block_target = 8 * 1024 * 1024
    elif ("v5 lite" in kind) or ("v5e" in kind):
        block_target = 3 * 1024 * 1024
    else:
        block_target = 6 * 1024 * 1024

    bytes_per_row = (p_item + t_item) * L_lanes
    rows_per_core = pl.cdiv(B, num_cores)
    tile_from_bytes = max(rows_chunk,
                          _round_down(block_target // bytes_per_row, rows_chunk))
    tile_b = min(tile_from_bytes, _round_up(rows_per_core, rows_chunk))
    num_tiles = pl.cdiv(rows_per_core, tile_b)
    needs_row_mask = (num_cores * num_tiles * tile_b) != B

    last_block = pl.cdiv(B, tile_b) - 1

    def row_block(c, t):
        # Clamp so a ragged tail never DMAs a fully out-of-bounds block; the in-kernel
        # row mask (from the logical tile position) zeroes duplicated / OOB rows.
        return (jnp.minimum(c * num_tiles + t, last_block), 0)

    acc_spec = pl.BlockSpec((None, 8, L), lambda c, t: (c, 0, 0))
    acc_shape = jax.ShapeDtypeStruct((num_cores, 8, L), jnp.float32)

    kernel = _make_kernel(B=B, L=L, tile_b=tile_b, rows_chunk=rows_chunk,
                          num_tiles=num_tiles, needs_row_mask=needs_row_mask,
                          hard_targets=hard_targets)

    n = B * L
    block_bytes = tile_b * L_lanes * (p_item + t_item)
    vmem_cap = 48 * 1024 * 1024 if "v7" in kind else 100 * 1024 * 1024
    vmem_limit = int(min(vmem_cap,
                         max(32 * 1024 * 1024, 2 * block_bytes + 8 * 1024 * 1024)))

    cost = pl.CostEstimate(
        flops=10 * n,
        transcendentals=(n if hard_targets else 2 * n),
        bytes_accessed=n * (p_item + t_item) + 4 * num_cores * 8 * L * 4,
    )

    bce_acc, cnt_acc, psq_acc, tsq_acc = pl.pallas_call(
        kernel,
        out_shape=(acc_shape,) * 4,
        grid_spec=pltpu.PrefetchScalarGridSpec(
            num_scalar_prefetch=0,
            grid=(num_cores, num_tiles),
            in_specs=[
                pl.BlockSpec((tile_b, L), row_block),   # pred, native dtype
                pl.BlockSpec((tile_b, L), row_block),   # target, native dtype
            ],
            out_specs=[acc_spec] * 4,
        ),
        compiler_params=pltpu.CompilerParams(
            dimension_semantics=("parallel", "arbitrary"),
            vmem_limit_bytes=vmem_limit,
        ),
        cost_estimate=cost,
    )(pred, target)

    # Final cross-lane reductions + scalar math (tiny) stay in plain XLA.
    total = jnp.float32(B * L)
    bce_mean = jnp.sum(bce_acc) / total
    pos_count = jnp.sum(cnt_acc)
    neg_count = total - pos_count
    psq_sum = jnp.sum(psq_acc)
    nsq_sum = jnp.sum(tsq_acc) - psq_sum
    # NOTE: 0/0 -> NaN when either mask is empty, matching torch MSELoss on an empty tensor.
    fp_penalty = psq_sum / pos_count
    fn_penalty = nsq_sum / neg_count
    return bce_mean + 0.1 * fn_penalty + 0.1 * fp_penalty


def _reference_loss(pred, target):
    # Pure-JAX reference for validation (exact torch semantics).
    pred = pred.astype(jnp.float32)
    target = target.astype(jnp.float32)
    log_p = jnp.maximum(jnp.log(pred), -100.0)
    log_1mp = jnp.maximum(jnp.log(1.0 - pred), -100.0)
    bce = jnp.mean(-(target * log_p + (1.0 - target) * log_1mp))
    pos = target != 0.0
    pos_cnt = jnp.sum(pos.astype(jnp.float32))
    neg_cnt = pred.size - pos_cnt
    fp = jnp.sum(jnp.where(pos, (pred - target) ** 2, 0.0)) / pos_cnt
    fn = jnp.sum(jnp.where(pos, 0.0, pred * pred)) / neg_cnt
    return bce + 0.1 * fn + 0.1 * fp


if __name__ == "__main__":
    key = jax.random.PRNGKey(0)
    k1, k2, k3, k4 = jax.random.split(key, 4)

    # Small shapes consistent with a multi-label head.
    # (6, 80) exercises the ragged row-tail masking path; (128, 80) the fully-tiled path.
    pred_a = jax.nn.sigmoid(jax.random.normal(k1, (6, 80), jnp.float32))
    tgt_a = (jax.random.uniform(k2, (6, 80)) < 0.3).astype(jnp.float32)
    pred_b = jax.nn.sigmoid(jax.random.normal(k3, (128, 80), jnp.float32))
    tgt_b = (jax.random.uniform(k4, (128, 80)) < 0.3).astype(jnp.float32)

    cases = (
        (pred_a, tgt_a, True),    # ragged tail, single-log hard-target path
        (pred_b, tgt_b, True),    # exact tiling, no mask
        (pred_a, tgt_a, False),   # soft-target (two-log) path
    )
    for p_, t_, hard in cases:
        loss = multilabel_loss(p_, t_, hard_targets=hard)
        jax.block_until_ready(loss)
        ref = _reference_loss(p_, t_)
        assert jnp.allclose(loss, ref, rtol=1e-5, atol=1e-6), (hard, loss, ref)

    print("KERNEL_OK")
</pallas_src>

<mosaic_0001>
module attributes {stable_mosaic.version = 11 : i64} {
  func.func @kernel(%arg0: i32, %arg1: i32, %arg2: memref<64x80xf32, #tpu.memory_space<vmem>>, %arg3: memref<64x80xf32, #tpu.memory_space<vmem>>, %arg4: memref<1x8x80xf32, #tpu.memory_space<vmem>>, %arg5: memref<1x8x80xf32, #tpu.memory_space<vmem>>, %arg6: memref<1x8x80xf32, #tpu.memory_space<vmem>>, %arg7: memref<1x8x80xf32, #tpu.memory_space<vmem>>) attributes {dimension_semantics = [#tpu.dimension_semantics<parallel>, #tpu.dimension_semantics<arbitrary>], iteration_bounds = array<i64: 1, 1>, scalar_prefetch = 0 : i64, scratch_operands = 0 : i64, tpu.core_type = #tpu.core_type<tc>, window_params = [{transform_indices = @transform_0, window_bounds = array<i64: 64, 80>}, {transform_indices = @transform_1, window_bounds = array<i64: 64, 80>}, {transform_indices = @transform_2, window_bounds = array<i64: 1, 8, 80>}, {transform_indices = @transform_3, window_bounds = array<i64: 1, 8, 80>}, {transform_indices = @transform_4, window_bounds = array<i64: 1, 8, 80>}, {transform_indices = @transform_5, window_bounds = array<i64: 1, 8, 80>}]} {
    %c0_i32 = arith.constant 0 : i32
    %0 = arith.cmpi eq, %arg1, %c0_i32 : i32
    %1 = arith.extui %0 : i1 to i32
    %c0_i32_0 = arith.constant 0 : i32
    %2 = arith.cmpi ne, %1, %c0_i32_0 : i32
    scf.if %2 {
      %cst_36 = arith.constant 0.000000e+00 : f32
      %125 = vector.broadcast %cst_36 : f32 to vector<8x80xf32>
      %c0_37 = arith.constant 0 : index
      %c0_38 = arith.constant 0 : index
      %c0_39 = arith.constant 0 : index
      %126 = vector.load %arg4[%c0_37, %c0_38, %c0_39] : memref<1x8x80xf32, #tpu.memory_space<vmem>>, vector<1x8x80xf32>
      %127 = vector.shape_cast %126 : vector<1x8x80xf32> to vector<8x80xf32>
      %128 = vector.shape_cast %125 : vector<8x80xf32> to vector<1x8x80xf32>
      tpu.vector_store %arg4[%c0_37, %c0_38, %c0_39], %128 {strides = array<i32>} : memref<1x8x80xf32, #tpu.memory_space<vmem>>, vector<1x8x80xf32>,
      %cst_40 = arith.constant 0.000000e+00 : f32
      %129 = vector.broadcast %cst_40 : f32 to vector<8x80xf32>
      %c0_41 = arith.constant 0 : index
      %c0_42 = arith.constant 0 : index
      %c0_43 = arith.constant 0 : index
      %130 = vector.load %arg5[%c0_41, %c0_42, %c0_43] : memref<1x8x80xf32, #tpu.memory_space<vmem>>, vector<1x8x80xf32>
      %131 = vector.shape_cast %130 : vector<1x8x80xf32> to vector<8x80xf32>
      %132 = vector.shape_cast %129 : vector<8x80xf32> to vector<1x8x80xf32>
      tpu.vector_store %arg5[%c0_41, %c0_42, %c0_43], %132 {strides = array<i32>} : memref<1x8x80xf32, #tpu.memory_space<vmem>>, vector<1x8x80xf32>,
      %cst_44 = arith.constant 0.000000e+00 : f32
      %133 = vector.broadcast %cst_44 : f32 to vector<8x80xf32>
      %c0_45 = arith.constant 0 : index
      %c0_46 = arith.constant 0 : index
      %c0_47 = arith.constant 0 : index
      %134 = vector.load %arg6[%c0_45, %c0_46, %c0_47] : memref<1x8x80xf32, #tpu.memory_space<vmem>>, vector<1x8x80xf32>
      %135 = vector.shape_cast %134 : vector<1x8x80xf32> to vector<8x80xf32>
      %136 = vector.shape_cast %133 : vector<8x80xf32> to vector<1x8x80xf32>
      tpu.vector_store %arg6[%c0_45, %c0_46, %c0_47], %136 {strides = array<i32>} : memref<1x8x80xf32, #tpu.memory_space<vmem>>, vector<1x8x80xf32>,
      %cst_48 = arith.constant 0.000000e+00 : f32
      %137 = vector.broadcast %cst_48 : f32 to vector<8x80xf32>
      %c0_49 = arith.constant 0 : index
      %c0_50 = arith.constant 0 : index
      %c0_51 = arith.constant 0 : index
      %138 = vector.load %arg7[%c0_49, %c0_50, %c0_51] : memref<1x8x80xf32, #tpu.memory_space<vmem>>, vector<1x8x80xf32>
      %139 = vector.shape_cast %138 : vector<1x8x80xf32> to vector<8x80xf32>
      %140 = vector.shape_cast %137 : vector<8x80xf32> to vector<1x8x80xf32>
      tpu.vector_store %arg7[%c0_49, %c0_50, %c0_51], %140 {strides = array<i32>} : memref<1x8x80xf32, #tpu.memory_space<vmem>>, vector<1x8x80xf32>,
    } else {
    }
    %c1_i32 = arith.constant 1 : i32
    %3 = arith.muli %arg0, %c1_i32 : i32
    %4 = arith.addi %3, %arg1 : i32
    %c64_i32 = arith.constant 64 : i32
    %5 = arith.muli %4, %c64_i32 : i32
    %cst = arith.constant 0.000000e+00 : f32
    %6 = vector.broadcast %cst : f32 to vector<8x80xf32>
    %c0_i32_1 = arith.constant 0 : i32
    %c64_i32_2 = arith.constant 64 : i32
    %7 = arith.muli %c0_i32_1, %c64_i32_2 : i32
    %8 = tpu.assume_multiple %7, 64 : i32
    %9 = arith.index_cast %8 : i32 to index
    %c0 = arith.constant 0 : index
    %10 = vector.load %arg2[%9, %c0] : memref<64x80xf32, #tpu.memory_space<vmem>>, vector<64x80xf32>
    %11 = arith.index_cast %8 : i32 to index
    %c0_3 = arith.constant 0 : index
    %12 = vector.load %arg3[%11, %c0_3] : memref<64x80xf32, #tpu.memory_space<vmem>>, vector<64x80xf32>
    %13 = tpu.iota {dimensions = array<i32: 0>} : vector<64x80xi32>
    %14 = arith.addi %5, %8 : i32
    %15 = vector.broadcast %14 : i32 to vector<64x80xi32>
    %16 = arith.addi %15, %13 : vector<64x80xi32>
    %c6_i32 = arith.constant 6 : i32
    %17 = vector.broadcast %c6_i32 : i32 to vector<64x80xi32>
    %18 = arith.cmpi slt, %16, %17 : vector<64x80xi32>
    %cst_4 = arith.constant 0.000000e+00 : f32
    %19 = vector.broadcast %cst_4 : f32 to vector<64x80xf32>
    %20 = arith.select %18, %10, %19 : vector<64x80xi1>, vector<64x80xf32>
    %cst_5 = arith.constant 0.000000e+00 : f32
    %21 = vector.broadcast %cst_5 : f32 to vector<64x80xf32>
    %22 = arith.select %18, %12, %21 : vector<64x80xi1>, vector<64x80xf32>
    %cst_6 = arith.constant 0.000000e+00 : f32
    %23 = vector.broadcast %cst_6 : f32 to vector<64x80xf32>
    %24 = arith.cmpf one, %22, %23 : vector<64x80xf32>
    %cst_7 = arith.constant 1.000000e+00 : f32
    %25 = vector.broadcast %cst_7 : f32 to vector<64x80xf32>
    %26 = arith.subf %25, %20 : vector<64x80xf32>
    %27 = arith.select %24, %20, %26 : vector<64x80xi1>, vector<64x80xf32>
    %28 = math.log %27 : vector<64x80xf32>
    %cst_8 = arith.constant -1.000000e+02 : f32
    %29 = vector.broadcast %cst_8 : f32 to vector<64x80xf32>
    %30 = arith.maximumf %28, %29 : vector<64x80xf32>
    %cst_9 = arith.constant 0.000000e+00 : f32
    %31 = vector.broadcast %cst_9 : f32 to vector<64x80xf32>
    %32 = arith.subf %31, %30 : vector<64x80xf32>
    %33 = arith.subf %20, %22 : vector<64x80xf32>
    %34 = arith.mulf %33, %33 : vector<64x80xf32>
    %cst_10 = arith.constant 0.000000e+00 : f32
    %35 = vector.broadcast %cst_10 : f32 to vector<64x80xf32>
    %36 = arith.select %24, %34, %35 : vector<64x80xi1>, vector<64x80xf32>
    %37 = vector.extract_strided_slice %32 {offsets = [0, 0], sizes = [8, 80], strides = [1, 1]} : vector<64x80xf32> to vector<8x80xf32>
    %38 = vector.extract_strided_slice %32 {offsets = [8, 0], sizes = [8, 80], strides = [1, 1]} : vector<64x80xf32> to vector<8x80xf32>
    %39 = arith.addf %37, %38 : vector<8x80xf32>
    %40 = vector.extract_strided_slice %32 {offsets = [16, 0], sizes = [8, 80], strides = [1, 1]} : vector<64x80xf32> to vector<8x80xf32>
    %41 = arith.addf %39, %40 : vector<8x80xf32>
    %42 = vector.extract_strided_slice %32 {offsets = [24, 0], sizes = [8, 80], strides = [1, 1]} : vector<64x80xf32> to vector<8x80xf32>
    %43 = arith.addf %41, %42 : vector<8x80xf32>
    %44 = vector.extract_strided_slice %32 {offsets = [32, 0], sizes = [8, 80], strides = [1, 1]} : vector<64x80xf32> to vector<8x80xf32>
    %45 = arith.addf %43, %44 : vector<8x80xf32>
    %46 = vector.extract_strided_slice %32 {offsets = [40, 0], sizes = [8, 80], strides = [1, 1]} : vector<64x80xf32> to vector<8x80xf32>
    %47 = arith.addf %45, %46 : vector<8x80xf32>
    %48 = vector.extract_strided_slice %32 {offsets = [48, 0], sizes = [8, 80], strides = [1, 1]} : vector<64x80xf32> to vector<8x80xf32>
    %49 = arith.addf %47, %48 : vector<8x80xf32>
    %50 = vector.extract_strided_slice %32 {offsets = [56, 0], sizes = [8, 80], strides = [1, 1]} : vector<64x80xf32> to vector<8x80xf32>
    %51 = arith.addf %49, %50 : vector<8x80xf32>
    %52 = arith.addf %6, %51 : vector<8x80xf32>
    %53 = vector.extract_strided_slice %22 {offsets = [0, 0], sizes = [8, 80], strides = [1, 1]} : vector<64x80xf32> to vector<8x80xf32>
    %54 = vector.extract_strided_slice %22 {offsets = [8, 0], sizes = [8, 80], strides = [1, 1]} : vector<64x80xf32> to vector<8x80xf32>
    %55 = arith.addf %53, %54 : vector<8x80xf32>
    %56 = vector.extract_strided_slice %22 {offsets = [16, 0], sizes = [8, 80], strides = [1, 1]} : vector<64x80xf32> to vector<8x80xf32>
    %57 = arith.addf %55, %56 : vector<8x80xf32>
    %58 = vector.extract_strided_slice %22 {offsets = [24, 0], sizes = [8, 80], strides = [1, 1]} : vector<64x80xf32> to vector<8x80xf32>
    %59 = arith.addf %57, %58 : vector<8x80xf32>
    %60 = vector.extract_strided_slice %22 {offsets = [32, 0], sizes = [8, 80], strides = [1, 1]} : vector<64x80xf32> to vector<8x80xf32>
    %61 = arith.addf %59, %60 : vector<8x80xf32>
    %62 = vector.extract_strided_slice %22 {offsets = [40, 0], sizes = [8, 80], strides = [1, 1]} : vector<64x80xf32> to vector<8x80xf32>
    %63 = arith.addf %61, %62 : vector<8x80xf32>
    %64 = vector.extract_strided_slice %22 {offsets = [48, 0], sizes = [8, 80], strides = [1, 1]} : vector<64x80xf32> to vector<8x80xf32>
    %65 = arith.addf %63, %64 : vector<8x80xf32>
    %66 = vector.extract_strided_slice %22 {offsets = [56, 0], sizes = [8, 80], strides = [1, 1]} : vector<64x80xf32> to vector<8x80xf32>
    %67 = arith.addf %65, %66 : vector<8x80xf32>
    %68 = arith.addf %6, %67 : vector<8x80xf32>
    %69 = vector.extract_strided_slice %36 {offsets = [0, 0], sizes = [8, 80], strides = [1, 1]} : vector<64x80xf32> to vector<8x80xf32>
    %70 = vector.extract_strided_slice %36 {offsets = [8, 0], sizes = [8, 80], strides = [1, 1]} : vector<64x80xf32> to vector<8x80xf32>
    %71 = arith.addf %69, %70 : vector<8x80xf32>
    %72 = vector.extract_strided_slice %36 {offsets = [16, 0], sizes = [8, 80], strides = [1, 1]} : vector<64x80xf32> to vector<8x80xf32>
    %73 = arith.addf %71, %72 : vector<8x80xf32>
    %74 = vector.extract_strided_slice %36 {offsets = [24, 0], sizes = [8, 80], strides = [1, 1]} : vector<64x80xf32> to vector<8x80xf32>
    %75 = arith.addf %73, %74 : vector<8x80xf32>
    %76 = vector.extract_strided_slice %36 {offsets = [32, 0], sizes = [8, 80], strides = [1, 1]} : vector<64x80xf32> to vector<8x80xf32>
    %77 = arith.addf %75, %76 : vector<8x80xf32>
    %78 = vector.extract_strided_slice %36 {offsets = [40, 0], sizes = [8, 80], strides = [1, 1]} : vector<64x80xf32> to vector<8x80xf32>
    %79 = arith.addf %77, %78 : vector<8x80xf32>
    %80 = vector.extract_strided_slice %36 {offsets = [48, 0], sizes = [8, 80], strides = [1, 1]} : vector<64x80xf32> to vector<8x80xf32>
    %81 = arith.addf %79, %80 : vector<8x80xf32>
    %82 = vector.extract_strided_slice %36 {offsets = [56, 0], sizes = [8, 80], strides = [1, 1]} : vector<64x80xf32> to vector<8x80xf32>
    %83 = arith.addf %81, %82 : vector<8x80xf32>
    %84 = arith.addf %6, %83 : vector<8x80xf32>
    %85 = vector.extract_strided_slice %34 {offsets = [0, 0], sizes = [8, 80], strides = [1, 1]} : vector<64x80xf32> to vector<8x80xf32>
    %86 = vector.extract_strided_slice %34 {offsets = [8, 0], sizes = [8, 80], strides = [1, 1]} : vector<64x80xf32> to vector<8x80xf32>
    %87 = arith.addf %85, %86 : vector<8x80xf32>
    %88 = vector.extract_strided_slice %34 {offsets = [16, 0], sizes = [8, 80], strides = [1, 1]} : vector<64x80xf32> to vector<8x80xf32>
    %89 = arith.addf %87, %88 : vector<8x80xf32>
    %90 = vector.extract_strided_slice %34 {offsets = [24, 0], sizes = [8, 80], strides = [1, 1]} : vector<64x80xf32> to vector<8x80xf32>
    %91 = arith.addf %89, %90 : vector<8x80xf32>
    %92 = vector.extract_strided_slice %34 {offsets = [32, 0], sizes = [8, 80], strides = [1, 1]} : vector<64x80xf32> to vector<8x80xf32>
    %93 = arith.addf %91, %92 : vector<8x80xf32>
    %94 = vector.extract_strided_slice %34 {offsets = [40, 0], sizes = [8, 80], strides = [1, 1]} : vector<64x80xf32> to vector<8x80xf32>
    %95 = arith.addf %93, %94 : vector<8x80xf32>
    %96 = vector.extract_strided_slice %34 {offsets = [48, 0], sizes = [8, 80], strides = [1, 1]} : vector<64x80xf32> to vector<8x80xf32>
    %97 = arith.addf %95, %96 : vector<8x80xf32>
    %98 = vector.extract_strided_slice %34 {offsets = [56, 0], sizes = [8, 80], strides = [1, 1]} : vector<64x80xf32> to vector<8x80xf32>
    %99 = arith.addf %97, %98 : vector<8x80xf32>
    %100 = arith.addf %6, %99 : vector<8x80xf32>
    %c1_i32_11 = arith.constant 1 : i32
    %c0_12 = arith.constant 0 : index
    %c0_13 = arith.constant 0 : index
    %c0_14 = arith.constant 0 : index
    %101 = vector.load %arg4[%c0_12, %c0_13, %c0_14] : memref<1x8x80xf32, #tpu.memory_space<vmem>>, vector<1x8x80xf32>
    %102 = vector.shape_cast %101 : vector<1x8x80xf32> to vector<8x80xf32>
    %103 = arith.addf %102, %52 : vector<8x80xf32>
    %c0_15 = arith.constant 0 : index
    %c0_16 = arith.constant 0 : index
    %c0_17 = arith.constant 0 : index
    %104 = vector.load %arg4[%c0_15, %c0_16, %c0_17] : memref<1x8x80xf32, #tpu.memory_space<vmem>>, vector<1x8x80xf32>
    %105 = vector.shape_cast %104 : vector<1x8x80xf32> to vector<8x80xf32>
    %106 = vector.shape_cast %103 : vector<8x80xf32> to vector<1x8x80xf32>
    tpu.vector_store %arg4[%c0_15, %c0_16, %c0_17], %106 {strides = array<i32>} : memref<1x8x80xf32, #tpu.memory_space<vmem>>, vector<1x8x80xf32>,
    %c0_18 = arith.constant 0 : index
    %c0_19 = arith.constant 0 : index
    %c0_20 = arith.constant 0 : index
    %107 = vector.load %arg5[%c0_18, %c0_19, %c0_20] : memref<1x8x80xf32, #tpu.memory_space<vmem>>, vector<1x8x80xf32>
    %108 = vector.shape_cast %107 : vector<1x8x80xf32> to vector<8x80xf32>
    %109 = arith.addf %108, %68 : vector<8x80xf32>
    %c0_21 = arith.constant 0 : index
    %c0_22 = arith.constant 0 : index
    %c0_23 = arith.constant 0 : index
    %110 = vector.load %arg5[%c0_21, %c0_22, %c0_23] : memref<1x8x80xf32, #tpu.memory_space<vmem>>, vector<1x8x80xf32>
    %111 = vector.shape_cast %110 : vector<1x8x80xf32> to vector<8x80xf32>
    %112 = vector.shape_cast %109 : vector<8x80xf32> to vector<1x8x80xf32>
    tpu.vector_store %arg5[%c0_21, %c0_22, %c0_23], %112 {strides = array<i32>} : memref<1x8x80xf32, #tpu.memory_space<vmem>>, vector<1x8x80xf32>,
    %c0_24 = arith.constant 0 : index
    %c0_25 = arith.constant 0 : index
    %c0_26 = arith.constant 0 : index
    %113 = vector.load %arg6[%c0_24, %c0_25, %c0_26] : memref<1x8x80xf32, #tpu.memory_space<vmem>>, vector<1x8x80xf32>
    %114 = vector.shape_cast %113 : vector<1x8x80xf32> to vector<8x80xf32>
    %115 = arith.addf %114, %84 : vector<8x80xf32>
    %c0_27 = arith.constant 0 : index
    %c0_28 = arith.constant 0 : index
    %c0_29 = arith.constant 0 : index
    %116 = vector.load %arg6[%c0_27, %c0_28, %c0_29] : memref<1x8x80xf32, #tpu.memory_space<vmem>>, vector<1x8x80xf32>
    %117 = vector.shape_cast %116 : vector<1x8x80xf32> to vector<8x80xf32>
    %118 = vector.shape_cast %115 : vector<8x80xf32> to vector<1x8x80xf32>
    tpu.vector_store %arg6[%c0_27, %c0_28, %c0_29], %118 {strides = array<i32>} : memref<1x8x80xf32, #tpu.memory_space<vmem>>, vector<1x8x80xf32>,
    %c0_30 = arith.constant 0 : index
    %c0_31 = arith.constant 0 : index
    %c0_32 = arith.constant 0 : index
    %119 = vector.load %arg7[%c0_30, %c0_31, %c0_32] : memref<1x8x80xf32, #tpu.memory_space<vmem>>, vector<1x8x80xf32>
    %120 = vector.shape_cast %119 : vector<1x8x80xf32> to vector<8x80xf32>
    %121 = arith.addf %120, %100 : vector<8x80xf32>
    %c0_33 = arith.constant 0 : index
    %c0_34 = arith.constant 0 : index
    %c0_35 = arith.constant 0 : index
    %122 = vector.load %arg7[%c0_33, %c0_34, %c0_35] : memref<1x8x80xf32, #tpu.memory_space<vmem>>, vector<1x8x80xf32>
    %123 = vector.shape_cast %122 : vector<1x8x80xf32> to vector<8x80xf32>
    %124 = vector.shape_cast %121 : vector<8x80xf32> to vector<1x8x80xf32>
    tpu.vector_store %arg7[%c0_33, %c0_34, %c0_35], %124 {strides = array<i32>} : memref<1x8x80xf32, #tpu.memory_space<vmem>>, vector<1x8x80xf32>,
    return
  }
  func.func @transform_0(%arg0: i32, %arg1: i32) -> (i32, i32) {
    %c1_i32 = arith.constant 1 : i32
    %0 = arith.muli %arg0, %c1_i32 : i32
    %1 = arith.addi %0, %arg1 : i32
    %c0_i32 = arith.constant 0 : i32
    %2 = arith.minsi %1, %c0_i32 : i32
    %c0_i32_0 = arith.constant 0 : i32
    %c0_i32_1 = arith.constant 0 : i32
    return %2, %c0_i32_0 : i32, i32
  }
  func.func @transform_1(%arg0: i32, %arg1: i32) -> (i32, i32) {
    %c1_i32 = arith.constant 1 : i32
    %0 = arith.muli %arg0, %c1_i32 : i32
    %1 = arith.addi %0, %arg1 : i32
    %c0_i32 = arith.constant 0 : i32
    %2 = arith.minsi %1, %c0_i32 : i32
    %c0_i32_0 = arith.constant 0 : i32
    %c0_i32_1 = arith.constant 0 : i32
    return %2, %c0_i32_0 : i32, i32
  }
  func.func @transform_2(%arg0: i32, %arg1: i32) -> (i32, i32, i32) {
    %c0_i32 = arith.constant 0 : i32
    %c0_i32_0 = arith.constant 0 : i32
    %c0_i32_1 = arith.constant 0 : i32
    return %arg0, %c0_i32, %c0_i32_0 : i32, i32, i32
  }
  func.func @transform_3(%arg0: i32, %arg1: i32) -> (i32, i32, i32) {
    %c0_i32 = arith.constant 0 : i32
    %c0_i32_0 = arith.constant 0 : i32
    %c0_i32_1 = arith.constant 0 : i32
    return %arg0, %c0_i32, %c0_i32_0 : i32, i32, i32
  }
  func.func @transform_4(%arg0: i32, %arg1: i32) -> (i32, i32, i32) {
    %c0_i32 = arith.constant 0 : i32
    %c0_i32_0 = arith.constant 0 : i32
    %c0_i32_1 = arith.constant 0 : i32
    return %arg0, %c0_i32, %c0_i32_0 : i32, i32, i32
  }
  func.func @transform_5(%arg0: i32, %arg1: i32) -> (i32, i32, i32) {
    %c0_i32 = arith.constant 0 : i32
    %c0_i32_0 = arith.constant 0 : i32
    %c0_i32_1 = arith.constant 0 : i32
    return %arg0, %c0_i32, %c0_i32_0 : i32, i32, i32
  }
}

</mosaic_0001>

<llo_original>
// kernel: tpu_custom_call.1
$region0: #{tpu_custom_call.1}
  #allocation0 [shape = 'u32[]', space=smem, size = 0x4, offset = 0x4, fixed_abs, tag = 'smem constant byte address 0x4 - core index']
  #allocation1 [shape = 'u32[144,128]{1,0:T(1,128)}', space=vmem, size = 0x12000, scoped, tag = 'internal scratch']
  %s0 = inlined_call_operand.hbm [shape: f32[6,80], index: 0, kind: input, shape index: {}]
  %s1 = inlined_call_operand.hbm [shape: f32[6,80], index: 1, kind: input, shape index: {}]
  %s2 = inlined_call_operand.hbm [shape: f32[1,8,80], index: 2, kind: output, shape index: {0}]
  %s3 = inlined_call_operand.hbm [shape: f32[1,8,80], index: 3, kind: output, shape index: {1}]
  %s4 = inlined_call_operand.hbm [shape: f32[1,8,80], index: 4, kind: output, shape index: {2}]
  %s5 = inlined_call_operand.hbm [shape: f32[1,8,80], index: 5, kind: output, shape index: {3}]
  %6 = xla_tuple %s2, %s3, %s4, %s5
  %s7 = sld [smem:[#allocation0]]
  $region54: #{tpu_custom_call.1} parent=0
    _
  %s9 = ssub.s32 1, %s7
  %s10 = scalar_select 0, %s9, %s7
  $region1: #{tpu_custom_call.1} parent=0
    #allocation2 [shape = 'u8[32768]{0}', space=vmem, size = 0x8000, scoped, tag = 'input window, operand 0, single buffered']
    #allocation3 [shape = 's32[1]{0}', space=sflag, size = 0x4, scoped, tag = 'scoped memory for tpu_custom_call.1']
    #allocation4 [shape = 's32[1]{0}', space=sflag, size = 0x4, scoped, tag = 'scoped memory for tpu_custom_call.1']
    #allocation5 [shape = 'u8[32768]{0}', space=vmem, size = 0x8000, scoped, tag = 'input window, operand 1, single buffered']
    #allocation6 [shape = 's32[1]{0}', space=sflag, size = 0x4, scoped, tag = 'scoped memory for tpu_custom_call.1']
    #allocation7 [shape = 'u8[4096]{0}', space=vmem, size = 0x1000, scoped, tag = 'output window, operand 0, single buffered']
    #allocation8 [shape = 'u8[4096]{0}', space=vmem, size = 0x1000, scoped, tag = 'output window, operand 1, single buffered']
    #allocation9 [shape = 's32[1]{0}', space=sflag, size = 0x4, scoped, tag = 'scoped memory for tpu_custom_call.1']
    #allocation10 [shape = 'u8[4096]{0}', space=vmem, size = 0x1000, scoped, tag = 'output window, operand 2, single buffered']
    #allocation11 [shape = 'u8[4096]{0}', space=vmem, size = 0x1000, scoped, tag = 'output window, operand 3, single buffered']
    #allocation12 [shape = 's32[1]{0}', space=sflag, size = 0x4, scoped, tag = 'scoped memory for tpu_custom_call.1']
    %11 = vsyncpa [#allocation3], 0
    %12 = vsyncpa [#allocation6], 0
    %13 = vsyncpa [#allocation4], 0
    %14 = vsyncpa [#allocation9], 0
    %15 = vsyncpa [#allocation12], 0
    // Predicated region
    $region2: #{tpu_custom_call.1} parent=1 // pred_check
      _
    $region3: #{tpu_custom_call.1} parent=1 // pred_check_branch
      %17 = sbr.rel (0) target = $region5
    $region4: #{tpu_custom_call.1} parent=1 // pred_region
      %s18 = sadd.s32 0, 0
      %p19 = scmp.lt.s32.totalorder %s18, 0
      %s20 = scalar_select %p19, %s18, 0
      %s21 = smul.u32 8, %s20
      %s22 = ssub.s32 1, %s21
      %s23 = smul.u32 128, %s22
      %s25 = ssub.s32 1024, %s23
      %26 = vsyncadd [#allocation3], %s25
      %p27 = scmp.ne.s32.totalorder 0, %s23
      %s28 = smul.addr %s21, 128
      %s29 = scalar_lea.hbm %s0, %s28
      %s30 = smul.u32 8, %s22
      %s31 = sshll.u32 [#allocation2], 4
      %s32 = int_to_ptr.vmem [resolvable:$true] %s31
      %s33 = sshll.u32 %s30, 4
      %37 = dma.hbm_to_vmem [thread:$0]  (%p27), %s29, %s33, %s32, [#allocation3], 128, 128, 8
    $region5: #{tpu_custom_call.1} parent=1 // pred_fallthru
      _
    // Predicated region
    $region6: #{tpu_custom_call.1} parent=1 // pred_check
      _
    $region7: #{tpu_custom_call.1} parent=1 // pred_check_branch
      %39 = sbr.rel (0) target = $region9
    $region8: #{tpu_custom_call.1} parent=1 // pred_region
      %s40 = sadd.s32 0, 0
      %p41 = scmp.lt.s32.totalorder %s40, 0
      %s42 = scalar_select %p41, %s40, 0
      %s43 = smul.u32 8, %s42
      %s44 = ssub.s32 1, %s43
      %s45 = smul.u32 128, %s44
      %s47 = ssub.s32 1024, %s45
      %48 = vsyncadd [#allocation6], %s47
      %p49 = scmp.ne.s32.totalorder 0, %s45
      %s50 = smul.addr %s43, 128
      %s51 = scalar_lea.hbm %s1, %s50
      %s52 = smul.u32 8, %s44
      %s53 = sshll.u32 [#allocation5], 4
      %s54 = int_to_ptr.vmem [resolvable:$true] %s53
      %s55 = sshll.u32 %s52, 4
      %59 = dma.hbm_to_vmem [thread:$0]  (%p49), %s51, %s55, %s54, [#allocation6], 128, 128, 8
    $region9: #{tpu_custom_call.1} parent=1 // pred_fallthru
      _
    // Predicated region
    $region10: #{tpu_custom_call.1} parent=1 // pred_check
      _
    $region11: #{tpu_custom_call.1} parent=1 // pred_check_branch
      %61 = sbr.rel (0) target = $region13
    $region12: #{tpu_custom_call.1} parent=1 // pred_region
      %62 = dma.done [#allocation3], 1024
    $region13: #{tpu_custom_call.1} parent=1 // pred_fallthru
      _
    // Predicated region
    $region14: #{tpu_custom_call.1} parent=1 // pred_check
      _
    $region15: #{tpu_custom_call.1} parent=1 // pred_check_branch
      %64 = sbr.rel (0) target = $region17
    $region16: #{tpu_custom_call.1} parent=1 // pred_region
      %65 = dma.done [#allocation6], 1024
    $region17: #{tpu_custom_call.1} parent=1 // pred_fallthru
      _
    %s66 = sadd.s32 0, 0
    %p67 = scmp.lt.s32.totalorder %s66, 0
    %s68 = scalar_select %p67, %s66, 0
    %s69 = smul.u32 8, %s68
    %s70 = ssub.s32 1, %s69
    %s71 = smul.u32 128, %s70
    %s72 = sadd.s32 0, 0
    %p73 = scmp.lt.s32.totalorder %s72, 0
    %s74 = scalar_select %p73, %s72, 0
    %s75 = smul.u32 8, %s74
    %s76 = ssub.s32 1, %s75
    %s77 = smul.u32 128, %s76
    %p78 = scmp.eq.s32.totalorder 0, 0
    // Predicated region
    $region18: #{tpu_custom_call.1} parent=1 // pred_check
      %p79 = pneg %p78
    $region19: #{tpu_custom_call.1} parent=1 // pred_check_branch
      %81 = sbr.rel (%p79) target = $region21
    $region20: #{tpu_custom_call.1} parent=1 // pred_region
      %vm82 = vcmask 654336
      %83 = vst.msk [vmem:[#allocation7] sm:$0xff] %vm82, 0.0
      %84 = vst.msk [vmem:[#allocation8] sm:$0xff] %vm82, 0.0
      %85 = vst.msk [vmem:[#allocation10] sm:$0xff] %vm82, 0.0
      %86 = vst.msk [vmem:[#allocation11] sm:$0xff] %vm82, 0.0
    $region21: #{tpu_custom_call.1} parent=1 // pred_fallthru
      _
    %s87 = sadd.s32 0, 0
    %s88 = smul.u32 %s87, 64
    %v89 = vld [vmem:[#allocation2] sm:$0xff]
    %v90 = vld [vmem:[#allocation2 + $0x8] sm:$0xff]
    %v91 = vld [vmem:[#allocation2 + $0x10] sm:$0xff]
    %v92 = vld [vmem:[#allocation2 + $0x18] sm:$0xff]
    %v93 = vld [vmem:[#allocation2 + $0x20] sm:$0xff]
    %v94 = vld [vmem:[#allocation2 + $0x28] sm:$0xff]
    %v95 = vld [vmem:[#allocation2 + $0x30] sm:$0xff]
    %v96 = vld [vmem:[#allocation2 + $0x38] sm:$0xff]
    %v97 = vld [vmem:[#allocation5] sm:$0xff]
    %v98 = vld [vmem:[#allocation5 + $0x8] sm:$0xff]
    %v99 = vld [vmem:[#allocation5 + $0x10] sm:$0xff]
    %v100 = vld [vmem:[#allocation5 + $0x18] sm:$0xff]
    %v101 = vld [vmem:[#allocation5 + $0x20] sm:$0xff]
    %v102 = vld [vmem:[#allocation5 + $0x28] sm:$0xff]
    %v103 = vld [vmem:[#allocation5 + $0x30] sm:$0xff]
    %v104 = vld [vmem:[#allocation5 + $0x38] sm:$0xff]
    %v105 = vlaneseq
    %v106 = vshrl.u32 %v105, 7
    %v107 = vadd.s32 %v106, 8
    %v108 = vadd.s32 %v106, 16
    %v109 = vadd.s32 %v106, 24
    %v110 = vadd.s32 %v106, 32
    %v111 = vadd.s32 %v106, 40
    %v112 = vadd.s32 %v106, 48
    %v113 = vadd.s32 %v106, 56
    %s114 = sadd.s32 %s88, 0
    %v115 = vstv %s114
    %v116 = vadd.s32 %v115, %v106
    %v117 = vadd.s32 %v115, %v107
    %v118 = vadd.s32 %v115, %v108
    %v119 = vadd.s32 %v115, %v109
    %v120 = vadd.s32 %v115, %v110
    %v121 = vadd.s32 %v115, %v111
    %v122 = vadd.s32 %v115, %v112
    %v123 = vadd.s32 %v115, %v113
    %vm124 = vcmp.lt.s32.totalorder %v116, 6
    %vm125 = vcmp.lt.s32.totalorder %v117, 6
    %vm126 = vcmp.lt.s32.totalorder %v118, 6
    %vm127 = vcmp.lt.s32.totalorder %v119, 6
    %vm128 = vcmp.lt.s32.totalorder %v120, 6
    %vm129 = vcmp.lt.s32.totalorder %v121, 6
    %vm130 = vcmp.lt.s32.totalorder %v122, 6
    %vm131 = vcmp.lt.s32.totalorder %v123, 6
    %v132 = vsel %vm124, %v89, 0.0
    %v133 = vsel %vm125, %v90, 0.0
    %v134 = vsel %vm126, %v91, 0.0
    %v135 = vsel %vm127, %v92, 0.0
    %v136 = vsel %vm128, %v93, 0.0
    %v137 = vsel %vm129, %v94, 0.0
    %v138 = vsel %vm130, %v95, 0.0
    %v139 = vsel %vm131, %v96, 0.0
    %v140 = vsel %vm124, %v97, 0.0
    %v141 = vsel %vm125, %v98, 0.0
    %v142 = vsel %vm126, %v99, 0.0
    %v143 = vsel %vm127, %v100, 0.0
    %v144 = vsel %vm128, %v101, 0.0
    %v145 = vsel %vm129, %v102, 0.0
    %v146 = vsel %vm130, %v103, 0.0
    %v147 = vsel %vm131, %v104, 0.0
    %vm148 = vcmp.ne.f32.partialorder %v140, 0.0
    %vm149 = vcmp.ne.f32.partialorder %v141, 0.0
    %vm150 = vcmp.ne.f32.partialorder %v142, 0.0
    %vm151 = vcmp.ne.f32.partialorder %v143, 0.0
    %vm152 = vcmp.ne.f32.partialorder %v144, 0.0
    %vm153 = vcmp.ne.f32.partialorder %v145, 0.0
    %vm154 = vcmp.ne.f32.partialorder %v146, 0.0
    %vm155 = vcmp.ne.f32.partialorder %v147, 0.0
    %v156 = vsub.f32 1.0, %v132
    %v157 = vsub.f32 1.0, %v133
    %v158 = vsub.f32 1.0, %v134
    %v159 = vsub.f32 1.0, %v135
    %v160 = vsub.f32 1.0, %v136
    %v161 = vsub.f32 1.0, %v137
    %v162 = vsub.f32 1.0, %v138
    %v163 = vsub.f32 1.0, %v139
    %v164 = vsel %vm148, %v132, %v156
    %v165 = vsel %vm149, %v133, %v157
    %v166 = vsel %vm150, %v134, %v158
    %v167 = vsel %vm151, %v135, %v159
    %v168 = vsel %vm152, %v136, %v160
    %v169 = vsel %vm153, %v137, %v161
    %v170 = vsel %vm154, %v138, %v162
    %v171 = vsel %vm155, %v139, %v163
    %v172 = vlog2.pop %v164
    %v173 = vmul.f32 %v172, 0.6931472
    %v174 = vlog2.pop %v165
    %v175 = vmul.f32 %v174, 0.6931472
    %v176 = vlog2.pop %v166
    %v177 = vmul.f32 %v176, 0.6931472
    %v178 = vlog2.pop %v167
    %v179 = vmul.f32 %v178, 0.6931472
    %v180 = vlog2.pop %v168
    %v181 = vmul.f32 %v180, 0.6931472
    %v182 = vlog2.pop %v169
    %v183 = vmul.f32 %v182, 0.6931472
    %v184 = vlog2.pop %v170
    %v185 = vmul.f32 %v184, 0.6931472
    %v186 = vlog2.pop %v171
    %v187 = vmul.f32 %v186, 0.6931472
    %v188 = vmax.f32 %v173, -100.0
    %v189 = vmax.f32 %v175, -100.0
    %v190 = vmax.f32 %v177, -100.0
    %v191 = vmax.f32 %v179, -100.0
    %v192 = vmax.f32 %v181, -100.0
    %v193 = vmax.f32 %v183, -100.0
    %v194 = vmax.f32 %v185, -100.0
    %v195 = vmax.f32 %v187, -100.0
    %v196 = vsub.f32 0.0, %v188
    %v197 = vsub.f32 0.0, %v189
    %v198 = vsub.f32 0.0, %v190
    %v199 = vsub.f32 0.0, %v191
    %v200 = vsub.f32 0.0, %v192
    %v201 = vsub.f32 0.0, %v193
    %v202 = vsub.f32 0.0, %v194
    %v203 = vsub.f32 0.0, %v195
    %v204 = vsub.f32 %v132, %v140
    %v205 = vsub.f32 %v133, %v141
    %v206 = vsub.f32 %v134, %v142
    %v207 = vsub.f32 %v135, %v143
    %v208 = vsub.f32 %v136, %v144
    %v209 = vsub.f32 %v137, %v145
    %v210 = vsub.f32 %v138, %v146
    %v211 = vsub.f32 %v139, %v147
    %v212 = vmul.f32 %v204, %v204
    %v213 = vmul.f32 %v205, %v205
    %v214 = vmul.f32 %v206, %v206
    %v215 = vmul.f32 %v207, %v207
    %v216 = vmul.f32 %v208, %v208
    %v217 = vmul.f32 %v209, %v209
    %v218 = vmul.f32 %v210, %v210
    %v219 = vmul.f32 %v211, %v211
    %v220 = vsel %vm148, %v212, 0.0
    %v221 = vsel %vm149, %v213, 0.0
    %v222 = vsel %vm150, %v214, 0.0
    %v223 = vsel %vm151, %v215, 0.0
    %v224 = vsel %vm152, %v216, 0.0
    %v225 = vsel %vm153, %v217, 0.0
    %v226 = vsel %vm154, %v218, 0.0
    %v227 = vsel %vm155, %v219, 0.0
    %v228 = vadd.f32 %v196, %v197
    %v229 = vadd.f32 %v228, %v198
    %v230 = vadd.f32 %v229, %v199
    %v231 = vadd.f32 %v230, %v200
    %v232 = vadd.f32 %v231, %v201
    %v233 = vadd.f32 %v232, %v202
    %v234 = vadd.f32 %v233, %v203
    %v235 = vadd.f32 %v234, 0.0
    %v236 = vadd.f32 %v140, %v141
    %v237 = vadd.f32 %v236, %v142
    %v238 = vadd.f32 %v237, %v143
    %v239 = vadd.f32 %v238, %v144
    %v240 = vadd.f32 %v239, %v145
    %v241 = vadd.f32 %v240, %v146
    %v242 = vadd.f32 %v241, %v147
    %v243 = vadd.f32 %v242, 0.0
    %v244 = vadd.f32 %v220, %v221
    %v245 = vadd.f32 %v244, %v222
    %v246 = vadd.f32 %v245, %v223
    %v247 = vadd.f32 %v246, %v224
    %v248 = vadd.f32 %v247, %v225
    %v249 = vadd.f32 %v248, %v226
    %v250 = vadd.f32 %v249, %v227
    %v251 = vadd.f32 %v250, 0.0
    %v252 = vadd.f32 %v212, %v213
    %v253 = vadd.f32 %v252, %v214
    %v254 = vadd.f32 %v253, %v215
    %v255 = vadd.f32 %v254, %v216
    %v256 = vadd.f32 %v255, %v217
    %v257 = vadd.f32 %v256, %v218
    %v258 = vadd.f32 %v257, %v219
    %v259 = vadd.f32 %v258, 0.0
    %v260 = vld [vmem:[#allocation7] sm:$0xff]
    %v261 = vadd.f32 %v260, %v235
    %vm262 = vcmask 654336
    %263 = vst.msk [vmem:[#allocation7] sm:$0xff] %vm262, %v261
    %v264 = vld [vmem:[#allocation8] sm:$0xff]
    %v265 = vadd.f32 %v264, %v243
    %266 = vst.msk [vmem:[#allocation8] sm:$0xff] %vm262, %v265
    %v267 = vld [vmem:[#allocation10] sm:$0xff]
    %v268 = vadd.f32 %v267, %v251
    %269 = vst.msk [vmem:[#allocation10] sm:$0xff] %vm262, %v268
    %v270 = vld [vmem:[#allocation11] sm:$0xff]
    %v271 = vadd.f32 %v270, %v259
    %272 = vst.msk [vmem:[#allocation11] sm:$0xff] %vm262, %v271
    // Predicated region
    $region22: #{tpu_custom_call.1} parent=1 // pred_check
      _
    $region23: #{tpu_custom_call.1} parent=1 // pred_check_branch
      %274 = sbr.rel (0) target = $region25
    $region24: #{tpu_custom_call.1} parent=1 // pred_region
      %s276 = ssub.s32 128, 128
      %277 = vsyncadd [#allocation4], %s276
      %s279 = sshll.u32 [#allocation7], 4
      %s280 = int_to_ptr.vmem [resolvable:$true] %s279
      %282 = dma.vmem_to_hbm [thread:$0]  %s280, 128, %s2, [#allocation4]
    $region25: #{tpu_custom_call.1} parent=1 // pred_fallthru
      _
    // Predicated region
    $region26: #{tpu_custom_call.1} parent=1 // pred_check
      _
    $region27: #{tpu_custom_call.1} parent=1 // pred_check_branch
      %284 = sbr.rel (0) target = $region29
    $region28: #{tpu_custom_call.1} parent=1 // pred_region
      %s286 = ssub.s32 128, 128
      %287 = vsyncadd [#allocation9], %s286
      %s289 = sshll.u32 [#allocation8], 4
      %s290 = int_to_ptr.vmem [resolvable:$true] %s289
      %292 = dma.vmem_to_hbm [thread:$0]  %s290, 128, %s3, [#allocation9]
    $region29: #{tpu_custom_call.1} parent=1 // pred_fallthru
      _
    // Predicated region
    $region30: #{tpu_custom_call.1} parent=1 // pred_check
      _
    $region31: #{tpu_custom_call.1} parent=1 // pred_check_branch
      %294 = sbr.rel (0) target = $region33
    $region32: #{tpu_custom_call.1} parent=1 // pred_region
      %s296 = ssub.s32 128, 128
      %297 = vsyncadd [#allocation9], %s296
      %s299 = sshll.u32 [#allocation10], 4
      %s300 = int_to_ptr.vmem [resolvable:$true] %s299
      %302 = dma.vmem_to_hbm [thread:$0]  %s300, 128, %s4, [#allocation9]
    $region33: #{tpu_custom_call.1} parent=1 // pred_fallthru
      _
    // Predicated region
    $region34: #{tpu_custom_call.1} parent=1 // pred_check
      _
    $region35: #{tpu_custom_call.1} parent=1 // pred_check_branch
      %304 = sbr.rel (0) target = $region37
    $region36: #{tpu_custom_call.1} parent=1 // pred_region
      %s306 = ssub.s32 128, 128
      %307 = vsyncadd [#allocation12], %s306
      %s309 = sshll.u32 [#allocation11], 4
      %s310 = int_to_ptr.vmem [resolvable:$true] %s309
      %312 = dma.vmem_to_hbm [thread:$0]  %s310, 128, %s5, [#allocation12]
    $region37: #{tpu_custom_call.1} parent=1 // pred_fallthru
      _
    // Predicated region
    $region38: #{tpu_custom_call.1} parent=1 // pred_check
      _
    $region39: #{tpu_custom_call.1} parent=1 // pred_check_branch
      %314 = sbr.rel (0) target = $region41
    $region40: #{tpu_custom_call.1} parent=1 // pred_region
      %315 = dma.done [#allocation4], 128
    $region41: #{tpu_custom_call.1} parent=1 // pred_fallthru
      _
    // Predicated region
    $region42: #{tpu_custom_call.1} parent=1 // pred_check
      _
    $region43: #{tpu_custom_call.1} parent=1 // pred_check_branch
      %317 = sbr.rel (0) target = $region45
    $region44: #{tpu_custom_call.1} parent=1 // pred_region
      %318 = dma.done [#allocation9], 128
    $region45: #{tpu_custom_call.1} parent=1 // pred_fallthru
      _
    // Predicated region
    $region46: #{tpu_custom_call.1} parent=1 // pred_check
      _
    $region47: #{tpu_custom_call.1} parent=1 // pred_check_branch
      %320 = sbr.rel (0) target = $region49
    $region48: #{tpu_custom_call.1} parent=1 // pred_region
      %321 = dma.done [#allocation9], 128
    $region49: #{tpu_custom_call.1} parent=1 // pred_fallthru
      _
    // Predicated region
    $region50: #{tpu_custom_call.1} parent=1 // pred_check
      _
    $region51: #{tpu_custom_call.1} parent=1 // pred_check_branch
      %323 = sbr.rel (0) target = $region53
    $region52: #{tpu_custom_call.1} parent=1 // pred_region
      %324 = dma.done [#allocation12], 128
    $region53: #{tpu_custom_call.1} parent=1 // pred_fallthru
      _
    %325 = vsyncpa [#allocation3], 1
    %326 = vsyncpa [#allocation6], 1
    %327 = vsyncpa [#allocation4], 1
    %328 = vsyncpa [#allocation9], 1
    %329 = vsyncpa [#allocation12], 1

</llo_original>
